<compile_context>
chip_gen: v5e
topology: v5e:2x2
jax: 0.10.0
libtpu: 0.0.40
codegen_flags: <defaults>
</compile_context>

<pallas_src>
import jax
import jax.numpy as jnp
from jax.experimental import pallas as pl
from jax.experimental.pallas import tpu as pltpu


def _ca_sa_kernel(f1_ref, f2_ref, wqt_ref, wkt_ref, wvt_ref, o_ref):
    """One batch block: f1 (Bblk, N1, D), f2 (Bblk, N2, D) -> out (Bblk, N1, D)."""
    bblk, n1, d = f1_ref.shape
    _, n2, _ = f2_ref.shape
    in_dtype = f1_ref.dtype

    # Stack the batch block so each projection is ONE tall (Bblk*N, D) @ (D, D)
    # matmul (bigger MXU M-dimension, single weight push per projection per step).
    f1 = f1_ref[...].reshape(bblk * n1, d)
    f2 = f2_ref[...].reshape(bblk * n2, d)

    # nn.Linear(dim, dim, bias=False): y = x @ W^T.  Weights arrive already
    # transposed from the wrapper, so the contraction feeds the MXU directly
    # (no in-kernel transpose).  Operands stay in the input dtype; accumulate f32.
    q = jnp.dot(f1, wqt_ref[...], preferred_element_type=jnp.float32)
    k = jnp.dot(f2, wkt_ref[...], preferred_element_type=jnp.float32)
    v = jnp.dot(f2, wvt_ref[...], preferred_element_type=jnp.float32)
    q = q.astype(in_dtype).reshape(bblk, n1, d)
    k = k.astype(in_dtype).reshape(bblk, n2, d)
    v = v.astype(in_dtype).reshape(bblk, n2, d)

    # dots = Q @ K^T (no 1/sqrt(dim) scaling, matching the PyTorch module).
    # einsum contracts over the shared last dim -> no explicit transpose.
    dots = jnp.einsum("bqd,bkd->bqk", q, k,
                      preferred_element_type=jnp.float32)          # (Bblk, N1, N2) f32

    # Numerically stable softmax over the key axis; reciprocal on the EUP.
    m = jnp.max(dots, axis=-1, keepdims=True)
    e = jnp.exp(dots - m)
    attn = e * pl.reciprocal(jnp.sum(e, axis=-1, keepdims=True), approx=True)

    # out = attn @ V, MXU-native operand dtype, f32 accumulation.
    out = jnp.einsum("bqk,bkd->bqd", attn.astype(in_dtype), v,
                     preferred_element_type=jnp.float32)            # (Bblk, N1, D)

    o_ref[...] = out.astype(o_ref.dtype)


def _pick_batch_block(B, N1, N2, D, itemsize, vmem_budget_bytes=8 << 20):
    """Pick how many batch elements to process per grid step.

    Largest divisor of B whose per-step working set fits a conservative VMEM
    budget; for B >= 4 keep at least 2 (preferably an even number of) grid steps
    so v7x's two TensorCores can both be used via dimension_semantics=parallel.
    For tiny B (<= 3) one grid step over the whole batch is best (amortizes the
    ~0.35 us per-step pipeline overhead on single-TC v5e/v6e).
    """
    def fits(bblk):
        io = 2 * bblk * (N1 + N2 + N1) * D * itemsize          # double-buffered tiles
        tmp = bblk * (N1 + 2 * N2) * D * 4                     # q/k/v f32
        tmp += bblk * (2 * N1 * N2 + N1 * D) * 4               # dots/attn + out f32
        return io + tmp <= vmem_budget_bytes

    divisors = [b for b in range(1, B + 1) if B % b == 0 and fits(b)]
    if not divisors:
        return 1
    if B >= 4:
        multi = [b for b in divisors if B // b >= 2]
        if multi:
            even = [b for b in multi if (B // b) % 2 == 0]
            return max(even) if even else max(multi)
    return max(divisors)


def ca_sa(feat1, feat2, wq, wk, wv, *, batch_block=None):
    """feat1: (B, N1, D), feat2: (B, N2, D); wq/wk/wv: (D, D) in PyTorch (out, in) layout."""
    B, N1, D = feat1.shape
    B2, N2, D2 = feat2.shape
    assert B2 == B and D2 == D

    # Pre-transpose nn.Linear weights once on the host (free) so the kernel does a
    # plain row-major contraction; also match the activation dtype for the MXU.
    wq_t = wq.T.astype(feat1.dtype)
    wk_t = wk.T.astype(feat1.dtype)
    wv_t = wv.T.astype(feat1.dtype)

    if batch_block is None:
        batch_block = _pick_batch_block(B, N1, N2, D, jnp.dtype(feat1.dtype).itemsize)
    assert B % batch_block == 0, "batch_block must divide B"
    grid = (B // batch_block,)

    grid_spec = pltpu.PrefetchScalarGridSpec(
        num_scalar_prefetch=0,
        grid=grid,
        in_specs=[
            pl.BlockSpec((batch_block, N1, D), lambda b: (b, 0, 0)),
            pl.BlockSpec((batch_block, N2, D), lambda b: (b, 0, 0)),
            # Grid-invariant weight tiles (constant index_map -> fetched once).
            pl.BlockSpec((D, D), lambda b: (0, 0)),
            pl.BlockSpec((D, D), lambda b: (0, 0)),
            pl.BlockSpec((D, D), lambda b: (0, 0)),
        ],
        out_specs=pl.BlockSpec((batch_block, N1, D), lambda b: (b, 0, 0)),
    )

    return pl.pallas_call(
        _ca_sa_kernel,
        out_shape=jax.ShapeDtypeStruct((B, N1, D), feat1.dtype),
        grid_spec=grid_spec,
        compiler_params=pltpu.CompilerParams(
            dimension_semantics=("parallel",),
        ),
    )(feat1, feat2, wq_t, wk_t, wv_t)


def ca_sa_reference(feat1, feat2, wq, wk, wv):
    q = feat1 @ wq.T
    k = feat2 @ wk.T
    v = feat2 @ wv.T
    dots = jnp.einsum("bqd,bkd->bqk", q, k)
    attn = jax.nn.softmax(dots, axis=-1)
    return jnp.einsum("bqk,bkd->bqd", attn, v)


if __name__ == "__main__":
    # Small deterministic shapes consistent with the module (dim=32).
    B, N1, N2, DIM = 2, 8, 8, 32

    key = jax.random.PRNGKey(0)
    k1, k2, k3, k4, k5 = jax.random.split(key, 5)

    feat1 = jax.random.normal(k1, (B, N1, DIM), dtype=jnp.float32)
    feat2 = jax.random.normal(k2, (B, N2, DIM), dtype=jnp.float32)

    # Deterministic weight init approximating nn.Linear's uniform init scale.
    bound = 1.0 / (DIM ** 0.5)
    wq = jax.random.uniform(k3, (DIM, DIM), jnp.float32, -bound, bound)
    wk = jax.random.uniform(k4, (DIM, DIM), jnp.float32, -bound, bound)
    wv = jax.random.uniform(k5, (DIM, DIM), jnp.float32, -bound, bound)

    out = jax.block_until_ready(ca_sa(feat1, feat2, wq, wk, wv))
    ref = ca_sa_reference(feat1, feat2, wq, wk, wv)

    assert out.shape == (B, N1, DIM)
    # Tolerance loosened slightly to cover the EUP approximate reciprocal in the
    # softmax denominator (pl.reciprocal(..., approx=True)); everything else is
    # f32 with f32 MXU accumulation.
    assert jnp.allclose(out, ref, atol=2e-2, rtol=2e-2), "mismatch vs reference"

    print("KERNEL_OK")
</pallas_src>

<mosaic_0001>
module attributes {stable_mosaic.version = 11 : i64} {
  func.func @_ca_sa_kernel(%arg0: i32, %arg1: memref<2x8x32xf32, #tpu.memory_space<vmem>>, %arg2: memref<2x8x32xf32, #tpu.memory_space<vmem>>, %arg3: memref<32x32xf32, #tpu.memory_space<vmem>>, %arg4: memref<32x32xf32, #tpu.memory_space<vmem>>, %arg5: memref<32x32xf32, #tpu.memory_space<vmem>>, %arg6: memref<2x8x32xf32, #tpu.memory_space<vmem>>) attributes {dimension_semantics = [#tpu.dimension_semantics<parallel>], iteration_bounds = array<i64: 1>, scalar_prefetch = 0 : i64, scratch_operands = 0 : i64, tpu.core_type = #tpu.core_type<tc>, window_params = [{transform_indices = @transform_0, window_bounds = array<i64: 2, 8, 32>}, {transform_indices = @transform_1, window_bounds = array<i64: 2, 8, 32>}, {pipeline_mode = #tpu.pipeline_mode<synchronous>, transform_indices = @transform_2, window_bounds = array<i64: 32, 32>}, {pipeline_mode = #tpu.pipeline_mode<synchronous>, transform_indices = @transform_3, window_bounds = array<i64: 32, 32>}, {pipeline_mode = #tpu.pipeline_mode<synchronous>, transform_indices = @transform_4, window_bounds = array<i64: 32, 32>}, {transform_indices = @transform_5, window_bounds = array<i64: 2, 8, 32>}]} {
    %c0 = arith.constant 0 : index
    %c0_0 = arith.constant 0 : index
    %c0_1 = arith.constant 0 : index
    %0 = vector.load %arg1[%c0, %c0_0, %c0_1] : memref<2x8x32xf32, #tpu.memory_space<vmem>>, vector<2x8x32xf32>
    %1 = vector.shape_cast %0 : vector<2x8x32xf32> to vector<16x32xf32>
    %c0_2 = arith.constant 0 : index
    %c0_3 = arith.constant 0 : index
    %c0_4 = arith.constant 0 : index
    %2 = vector.load %arg2[%c0_2, %c0_3, %c0_4] : memref<2x8x32xf32, #tpu.memory_space<vmem>>, vector<2x8x32xf32>
    %3 = vector.shape_cast %2 : vector<2x8x32xf32> to vector<16x32xf32>
    %c0_5 = arith.constant 0 : index
    %c0_6 = arith.constant 0 : index
    %4 = vector.load %arg3[%c0_5, %c0_6] : memref<32x32xf32, #tpu.memory_space<vmem>>, vector<32x32xf32>
    %cst = arith.constant dense<0.000000e+00> : vector<16x32xf32>
    %5 = tpu.matmul %1, %4, %cst {dimension_numbers = #tpu.dot_dimension_numbers<[1], [0], [0], [1], [0, 0, 1, 1], [], []>} : vector<16x32xf32>, vector<32x32xf32>, vector<16x32xf32> -> vector<16x32xf32>
    %c0_7 = arith.constant 0 : index
    %c0_8 = arith.constant 0 : index
    %6 = vector.load %arg4[%c0_7, %c0_8] : memref<32x32xf32, #tpu.memory_space<vmem>>, vector<32x32xf32>
    %cst_9 = arith.constant dense<0.000000e+00> : vector<16x32xf32>
    %7 = tpu.matmul %3, %6, %cst_9 {dimension_numbers = #tpu.dot_dimension_numbers<[1], [0], [0], [1], [0, 0, 1, 1], [], []>} : vector<16x32xf32>, vector<32x32xf32>, vector<16x32xf32> -> vector<16x32xf32>
    %c0_10 = arith.constant 0 : index
    %c0_11 = arith.constant 0 : index
    %8 = vector.load %arg5[%c0_10, %c0_11] : memref<32x32xf32, #tpu.memory_space<vmem>>, vector<32x32xf32>
    %cst_12 = arith.constant dense<0.000000e+00> : vector<16x32xf32>
    %9 = tpu.matmul %3, %8, %cst_12 {dimension_numbers = #tpu.dot_dimension_numbers<[1], [0], [0], [1], [0, 0, 1, 1], [], []>} : vector<16x32xf32>, vector<32x32xf32>, vector<16x32xf32> -> vector<16x32xf32>
    %10 = vector.shape_cast %5 : vector<16x32xf32> to vector<2x8x32xf32>
    %11 = vector.shape_cast %7 : vector<16x32xf32> to vector<2x8x32xf32>
    %12 = vector.shape_cast %9 : vector<16x32xf32> to vector<2x8x32xf32>
    "tpu.trace_start"() <{level = 10 : i32, message = "bqd,bkd->bqk"}> : () -> ()
    %cst_13 = arith.constant dense<0.000000e+00> : vector<2x8x8xf32>
    %13 = tpu.matmul %10, %11, %cst_13 {dimension_numbers = #tpu.dot_dimension_numbers<[2], [2], [1], [1], [0, 0, 0, 1, 1, 1], [0], [0]>} : vector<2x8x32xf32>, vector<2x8x32xf32>, vector<2x8x8xf32> -> vector<2x8x8xf32>
    "tpu.trace_stop"() : () -> ()
    %cst_14 = arith.constant dense<0xFF800000> : vector<2x8xf32>
    %14 = vector.multi_reduction <maximumf>, %13, %cst_14 [2] : vector<2x8x8xf32> to vector<2x8xf32>
    %15 = vector.shape_cast %14 : vector<2x8xf32> to vector<2x8x1xf32>
    %16 = vector.broadcast %15 : vector<2x8x1xf32> to vector<2x8x8xf32>
    %17 = arith.subf %13, %16 : vector<2x8x8xf32>
    %18 = math.exp %17 : vector<2x8x8xf32>
    %cst_15 = arith.constant dense<0.000000e+00> : vector<2x8xf32>
    %19 = vector.multi_reduction <add>, %18, %cst_15 [2] : vector<2x8x8xf32> to vector<2x8xf32>
    %20 = vector.shape_cast %19 : vector<2x8xf32> to vector<2x8x1xf32>
    %21 = tpu.reciprocal %20 {approx = true} : vector<2x8x1xf32> -> vector<2x8x1xf32>
    %22 = vector.broadcast %21 : vector<2x8x1xf32> to vector<2x8x8xf32>
    %23 = arith.mulf %18, %22 : vector<2x8x8xf32>
    "tpu.trace_start"() <{level = 10 : i32, message = "bqk,bkd->bqd"}> : () -> ()
    %cst_16 = arith.constant dense<0.000000e+00> : vector<2x8x32xf32>
    %24 = tpu.matmul %23, %12, %cst_16 {dimension_numbers = #tpu.dot_dimension_numbers<[2], [1], [1], [2], [0, 0, 0, 1, 1, 2], [0], [0]>} : vector<2x8x8xf32>, vector<2x8x32xf32>, vector<2x8x32xf32> -> vector<2x8x32xf32>
    "tpu.trace_stop"() : () -> ()
    %c0_17 = arith.constant 0 : index
    %c0_18 = arith.constant 0 : index
    %c0_19 = arith.constant 0 : index
    %25 = vector.load %arg6[%c0_17, %c0_18, %c0_19] : memref<2x8x32xf32, #tpu.memory_space<vmem>>, vector<2x8x32xf32>
    tpu.vector_store %arg6[%c0_17, %c0_18, %c0_19], %24 {strides = array<i32>} : memref<2x8x32xf32, #tpu.memory_space<vmem>>, vector<2x8x32xf32>,
    return
  }
  func.func @transform_0(%arg0: i32) -> (i32, i32, i32) {
    %c0_i32 = arith.constant 0 : i32
    %c0_i32_0 = arith.constant 0 : i32
    %c0_i32_1 = arith.constant 0 : i32
    return %arg0, %c0_i32, %c0_i32_0 : i32, i32, i32
  }
  func.func @transform_1(%arg0: i32) -> (i32, i32, i32) {
    %c0_i32 = arith.constant 0 : i32
    %c0_i32_0 = arith.constant 0 : i32
    %c0_i32_1 = arith.constant 0 : i32
    return %arg0, %c0_i32, %c0_i32_0 : i32, i32, i32
  }
  func.func @transform_2(%arg0: i32) -> (i32, i32) {
    %c0_i32 = arith.constant 0 : i32
    %c0_i32_0 = arith.constant 0 : i32
    %c0_i32_1 = arith.constant 0 : i32
    return %c0_i32, %c0_i32_0 : i32, i32
  }
  func.func @transform_3(%arg0: i32) -> (i32, i32) {
    %c0_i32 = arith.constant 0 : i32
    %c0_i32_0 = arith.constant 0 : i32
    %c0_i32_1 = arith.constant 0 : i32
    return %c0_i32, %c0_i32_0 : i32, i32
  }
  func.func @transform_4(%arg0: i32) -> (i32, i32) {
    %c0_i32 = arith.constant 0 : i32
    %c0_i32_0 = arith.constant 0 : i32
    %c0_i32_1 = arith.constant 0 : i32
    return %c0_i32, %c0_i32_0 : i32, i32
  }
  func.func @transform_5(%arg0: i32) -> (i32, i32, i32) {
    %c0_i32 = arith.constant 0 : i32
    %c0_i32_0 = arith.constant 0 : i32
    %c0_i32_1 = arith.constant 0 : i32
    return %arg0, %c0_i32, %c0_i32_0 : i32, i32, i32
  }
}

</mosaic_0001>

<llo_original>
// kernel: tpu_custom_call.1
$region0: #{tpu_custom_call.1}
  #allocation0 [shape = 'u32[]', space=smem, size = 0x4, offset = 0x4, fixed_abs, tag = 'smem constant byte address 0x4 - core index']
  #allocation1 [shape = 'u32[72,128]{1,0:T(1,128)}', space=vmem, size = 0x9000, scoped, tag = 'internal scratch']
  %s0 = inlined_call_operand.hbm [shape: f32[2,8,32], index: 0, kind: input, shape index: {}]
  %s1 = inlined_call_operand.hbm [shape: f32[2,8,32], index: 1, kind: input, shape index: {}]
  %s2 = inlined_call_operand.hbm [shape: f32[32,32], index: 2, kind: input, shape index: {}]
  %s3 = inlined_call_operand.hbm [shape: f32[32,32], index: 3, kind: input, shape index: {}]
  %s4 = inlined_call_operand.hbm [shape: f32[32,32], index: 4, kind: input, shape index: {}]
  %s5 = inlined_call_operand.hbm [shape: f32[2,8,32], index: 5, kind: output, shape index: {}]
  %s6 = sld [smem:[#allocation0]]
  $region50: #{tpu_custom_call.1} parent=0
    _
  %s8 = ssub.s32 1, %s6
  %s9 = scalar_select 0, %s8, %s6
  $region1: #{tpu_custom_call.1} parent=0
    #allocation2 [shape = 'u8[8192]{0}', space=vmem, size = 0x2000, scoped, tag = 'input window, operand 0, single buffered']
    #allocation3 [shape = 's32[1]{0}', space=sflag, size = 0x4, scoped, tag = 'scoped memory for tpu_custom_call.1']
    #allocation4 [shape = 's32[1]{0}', space=sflag, size = 0x4, scoped, tag = 'scoped memory for tpu_custom_call.1']
    #allocation5 [shape = 'u8[8192]{0}', space=vmem, size = 0x2000, scoped, tag = 'input window, operand 1, single buffered']
    #allocation6 [shape = 's32[1]{0}', space=sflag, size = 0x4, scoped, tag = 'scoped memory for tpu_custom_call.1']
    #allocation7 [shape = 'u8[16384]{0}', space=vmem, size = 0x4000, scoped, tag = 'input window, operand 2, single buffered']
    #allocation8 [shape = 'u8[16384]{0}', space=vmem, size = 0x4000, scoped, tag = 'input window, operand 3, single buffered']
    #allocation9 [shape = 's32[1]{0}', space=sflag, size = 0x4, scoped, tag = 'scoped memory for tpu_custom_call.1']
    #allocation10 [shape = 'u8[16384]{0}', space=vmem, size = 0x4000, scoped, tag = 'input window, operand 4, single buffered']
    #allocation11 [shape = 'u8[8192]{0}', space=vmem, size = 0x2000, scoped, tag = 'output window, operand 0, single buffered']
    %10 = vsyncpa [#allocation3], 0
    %11 = vsyncpa [#allocation6], 0
    %12 = vsyncpa [#allocation9], 0
    %13 = vsyncpa [#allocation4], 0
    // Predicated region
    $region2: #{tpu_custom_call.1} parent=1 // pred_check
      _
    $region3: #{tpu_custom_call.1} parent=1 // pred_check_branch
      %15 = sbr.rel (0) target = $region5
    $region4: #{tpu_custom_call.1} parent=1 // pred_region
      %17 = vsyncadd [#allocation3], 0
      %s18 = sshll.u32 %s0, 4
      %s19 = int_to_ptr.hbm [resolvable:$true] %s18
      %s20 = sshll.u32 [#allocation2], 4
      %s21 = int_to_ptr.vmem [resolvable:$true] %s20
      %26 = dma.hbm_to_vmem [thread:$0]  %s19, 256, %s21, [#allocation3], 128, 128, 8
    $region5: #{tpu_custom_call.1} parent=1 // pred_fallthru
      _
    // Predicated region
    $region6: #{tpu_custom_call.1} parent=1 // pred_check
      _
    $region7: #{tpu_custom_call.1} parent=1 // pred_check_branch
      %28 = sbr.rel (0) target = $region9
    $region8: #{tpu_custom_call.1} parent=1 // pred_region
      %30 = vsyncadd [#allocation6], 0
      %s31 = sshll.u32 %s1, 4
      %s32 = int_to_ptr.hbm [resolvable:$true] %s31
      %s33 = sshll.u32 [#allocation5], 4
      %s34 = int_to_ptr.vmem [resolvable:$true] %s33
      %39 = dma.hbm_to_vmem [thread:$0]  %s32, 256, %s34, [#allocation6], 128, 128, 8
    $region9: #{tpu_custom_call.1} parent=1 // pred_fallthru
      _
    // Predicated region
    $region10: #{tpu_custom_call.1} parent=1 // pred_check
      _
    $region11: #{tpu_custom_call.1} parent=1 // pred_check_branch
      %41 = sbr.rel (0) target = $region13
    $region12: #{tpu_custom_call.1} parent=1 // pred_region
      %43 = vsyncadd [#allocation6], 0
      %s44 = sshll.u32 %s2, 4
      %s45 = int_to_ptr.hbm [resolvable:$true] %s44
      %s46 = sshll.u32 [#allocation7], 4
      %s47 = int_to_ptr.vmem [resolvable:$true] %s46
      %52 = dma.hbm_to_vmem [thread:$0]  %s45, 512, %s47, [#allocation6], 128, 128, 8
    $region13: #{tpu_custom_call.1} parent=1 // pred_fallthru
      _
    // Predicated region
    $region14: #{tpu_custom_call.1} parent=1 // pred_check
      _
    $region15: #{tpu_custom_call.1} parent=1 // pred_check_branch
      %54 = sbr.rel (0) target = $region17
    $region16: #{tpu_custom_call.1} parent=1 // pred_region
      %56 = vsyncadd [#allocation9], 0
      %s57 = sshll.u32 %s3, 4
      %s58 = int_to_ptr.hbm [resolvable:$true] %s57
      %s59 = sshll.u32 [#allocation8], 4
      %s60 = int_to_ptr.vmem [resolvable:$true] %s59
      %65 = dma.hbm_to_vmem [thread:$0]  %s58, 512, %s60, [#allocation9], 128, 128, 8
    $region17: #{tpu_custom_call.1} parent=1 // pred_fallthru
      _
    // Predicated region
    $region18: #{tpu_custom_call.1} parent=1 // pred_check
      _
    $region19: #{tpu_custom_call.1} parent=1 // pred_check_branch
      %67 = sbr.rel (0) target = $region21
    $region20: #{tpu_custom_call.1} parent=1 // pred_region
      %69 = vsyncadd [#allocation9], 0
      %s70 = sshll.u32 %s4, 4
      %s71 = int_to_ptr.hbm [resolvable:$true] %s70
      %s72 = sshll.u32 [#allocation10], 4
      %s73 = int_to_ptr.vmem [resolvable:$true] %s72
      %78 = dma.hbm_to_vmem [thread:$0]  %s71, 512, %s73, [#allocation9], 128, 128, 8
    $region21: #{tpu_custom_call.1} parent=1 // pred_fallthru
      _
    // Predicated region
    $region22: #{tpu_custom_call.1} parent=1 // pred_check
      _
    $region23: #{tpu_custom_call.1} parent=1 // pred_check_branch
      %80 = sbr.rel (0) target = $region25
    $region24: #{tpu_custom_call.1} parent=1 // pred_region
      %82 = dma.done [#allocation3], 256
    $region25: #{tpu_custom_call.1} parent=1 // pred_fallthru
      _
    // Predicated region
    $region26: #{tpu_custom_call.1} parent=1 // pred_check
      _
    $region27: #{tpu_custom_call.1} parent=1 // pred_check_branch
      %84 = sbr.rel (0) target = $region29
    $region28: #{tpu_custom_call.1} parent=1 // pred_region
      %86 = dma.done [#allocation6], 256
    $region29: #{tpu_custom_call.1} parent=1 // pred_fallthru
      _
    // Predicated region
    $region30: #{tpu_custom_call.1} parent=1 // pred_check
      _
    $region31: #{tpu_custom_call.1} parent=1 // pred_check_branch
      %88 = sbr.rel (0) target = $region33
    $region32: #{tpu_custom_call.1} parent=1 // pred_region
      %90 = dma.done [#allocation6], 512
    $region33: #{tpu_custom_call.1} parent=1 // pred_fallthru
      _
    // Predicated region
    $region34: #{tpu_custom_call.1} parent=1 // pred_check
      _
    $region35: #{tpu_custom_call.1} parent=1 // pred_check_branch
      %92 = sbr.rel (0) target = $region37
    $region36: #{tpu_custom_call.1} parent=1 // pred_region
      %94 = dma.done [#allocation9], 512
    $region37: #{tpu_custom_call.1} parent=1 // pred_fallthru
      _
    // Predicated region
    $region38: #{tpu_custom_call.1} parent=1 // pred_check
      _
    $region39: #{tpu_custom_call.1} parent=1 // pred_check_branch
      %96 = sbr.rel (0) target = $region41
    $region40: #{tpu_custom_call.1} parent=1 // pred_region
      %98 = dma.done [#allocation9], 512
    $region41: #{tpu_custom_call.1} parent=1 // pred_fallthru
      _
    %v99 = vld [vmem:[#allocation2] sm:$0xff]
    %v100 = vld [vmem:[#allocation2 + $0x8] sm:$0xff]
    %v101 = vld [vmem:[#allocation5] sm:$0xff]
    %v102 = vld [vmem:[#allocation5 + $0x8] sm:$0xff]
    %v103 = vld [vmem:[#allocation7] sm:$0xff]
    %v104 = vld [vmem:[#allocation7 + $0x8] sm:$0xff]
    %v105 = vld [vmem:[#allocation7 + $0x10] sm:$0xff]
    %v106 = vld [vmem:[#allocation7 + $0x18] sm:$0xff]
    %vm107 = vcmask 261120
    %v109 = vsel %vm107, %v99, 0
    %v112 = vsel %vm107, %v100, 0
    %114 = vmatpush.msra.mxu0 0.0
    %115 = vmatpush.msra.mxu0 0.0
    %116 = vmatpush.msra.mxu0 0.0
    %117 = vmatpush.msra.mxu0 0.0
    %118 = vmatpush.msra.mxu0 0.0
    %119 = vmatpush.msra.mxu0 0.0
    %120 = vmatpush.msra.mxu0 0.0
    %121 = vmatpush.msra.mxu0 0.0
    %122 = vmatpush.msra.mxu0 0.0
    %123 = vmatpush.msra.mxu0 0.0
    %124 = vmatpush.msra.mxu0 0.0
    %125 = vmatpush.msra.mxu0 0.0
    %126 = vmatpush.msra.mxu0 %v106
    %127 = vmatpush.msra.mxu0 %v105
    %128 = vmatpush.msra.mxu0 %v104
    %129 = vmatpush.msra.mxu0 %v103
    %130 = vmatmul.f32.gmra.mxu0 %v109
    %v131 = vpop.f32.mrf.mxu0
    %v132 = vadd.f32 0.0, %v131
    %133 = vmatmul.f32.gmra.mxu0 %v112
    %v134 = vpop.f32.mrf.mxu0
    %v135 = vadd.f32 0.0, %v134
    %136 = vdwg.mxu0
    %v137 = vld [vmem:[#allocation8] sm:$0xff]
    %v138 = vld [vmem:[#allocation8 + $0x8] sm:$0xff]
    %v139 = vld [vmem:[#allocation8 + $0x10] sm:$0xff]
    %v140 = vld [vmem:[#allocation8 + $0x18] sm:$0xff]
    %v142 = vsel %vm107, %v101, 0
    %v145 = vsel %vm107, %v102, 0
    %147 = vmatpush.msra.mxu0 0.0
    %148 = vmatpush.msra.mxu0 0.0
    %149 = vmatpush.msra.mxu0 0.0
    %150 = vmatpush.msra.mxu0 0.0
    %151 = vmatpush.msra.mxu0 0.0
    %152 = vmatpush.msra.mxu0 0.0
    %153 = vmatpush.msra.mxu0 0.0
    %154 = vmatpush.msra.mxu0 0.0
    %155 = vmatpush.msra.mxu0 0.0
    %156 = vmatpush.msra.mxu0 0.0
    %157 = vmatpush.msra.mxu0 0.0
    %158 = vmatpush.msra.mxu0 0.0
    %159 = vmatpush.msra.mxu0 %v140
    %160 = vmatpush.msra.mxu0 %v139
    %161 = vmatpush.msra.mxu0 %v138
    %162 = vmatpush.msra.mxu0 %v137
    %163 = vmatmul.f32.gmra.mxu0 %v142
    %v164 = vpop.f32.mrf.mxu0
    %v165 = vadd.f32 0.0, %v164
    %166 = vmatmul.f32.gmra.mxu0 %v145
    %v167 = vpop.f32.mrf.mxu0
    %v168 = vadd.f32 0.0, %v167
    %169 = vdwg.mxu0
    %v170 = vld [vmem:[#allocation10] sm:$0xff]
    %v171 = vld [vmem:[#allocation10 + $0x8] sm:$0xff]
    %v172 = vld [vmem:[#allocation10 + $0x10] sm:$0xff]
    %v173 = vld [vmem:[#allocation10 + $0x18] sm:$0xff]
    %174 = vmatpush.msra.mxu0 0.0
    %175 = vmatpush.msra.mxu0 0.0
    %176 = vmatpush.msra.mxu0 0.0
    %177 = vmatpush.msra.mxu0 0.0
    %178 = vmatpush.msra.mxu0 0.0
    %179 = vmatpush.msra.mxu0 0.0
    %180 = vmatpush.msra.mxu0 0.0
    %181 = vmatpush.msra.mxu0 0.0
    %182 = vmatpush.msra.mxu0 0.0
    %183 = vmatpush.msra.mxu0 0.0
    %184 = vmatpush.msra.mxu0 0.0
    %185 = vmatpush.msra.mxu0 0.0
    %186 = vmatpush.msra.mxu0 %v173
    %187 = vmatpush.msra.mxu0 %v172
    %188 = vmatpush.msra.mxu0 %v171
    %189 = vmatpush.msra.mxu0 %v170
    %190 = vmatmul.f32.gmra.mxu0 %v142
    %v191 = vpop.f32.mrf.mxu0
    %v192 = vadd.f32 0.0, %v191
    %193 = vmatmul.f32.gmra.mxu0 %v145
    %v194 = vpop.f32.mrf.mxu0
    %v195 = vadd.f32 0.0, %v194
    %196 = vdwg.mxu0
    %v198 = vsel %vm107, %v132, 0
    %v201 = vsel %vm107, %v165, 0
    %203 = vmatpush.xpose.msra.mxu0 0.0
    %204 = vmatpush.xpose.msra.mxu0 0.0
    %205 = vmatpush.xpose.msra.mxu0 0.0
    %206 = vmatpush.xpose.msra.mxu0 0.0
    %207 = vmatpush.xpose.msra.mxu0 0.0
    %208 = vmatpush.xpose.msra.mxu0 0.0
    %209 = vmatpush.xpose.msra.mxu0 0.0
    %210 = vmatpush.xpose.msra.mxu0 0.0
    %211 = vmatpush.xpose.msra.mxu0 0.0
    %212 = vmatpush.xpose.msra.mxu0 0.0
    %213 = vmatpush.xpose.msra.mxu0 0.0
    %214 = vmatpush.xpose.msra.mxu0 0.0
    %215 = vmatpush.xpose.msra.mxu0 0.0
    %216 = vmatpush.xpose.msra.mxu0 0.0
    %217 = vmatpush.xpose.msra.mxu0 0.0
    %218 = vmatpush.xpose.msra.mxu0 %v201
    %219 = vmatmul.f32.gmra.mxu0 %v198
    %v220 = vpop.f32.mrf.mxu0
    %v221 = vadd.f32 0.0, %v220
    %222 = vdwg.mxu0
    %v224 = vsel %vm107, %v135, 0
    %v227 = vsel %vm107, %v168, 0
    %229 = vmatpush.xpose.msra.mxu0 0.0
    %230 = vmatpush.xpose.msra.mxu0 0.0
    %231 = vmatpush.xpose.msra.mxu0 0.0
    %232 = vmatpush.xpose.msra.mxu0 0.0
    %233 = vmatpush.xpose.msra.mxu0 0.0
    %234 = vmatpush.xpose.msra.mxu0 0.0
    %235 = vmatpush.xpose.msra.mxu0 0.0
    %236 = vmatpush.xpose.msra.mxu0 0.0
    %237 = vmatpush.xpose.msra.mxu0 0.0
    %238 = vmatpush.xpose.msra.mxu0 0.0
    %239 = vmatpush.xpose.msra.mxu0 0.0
    %240 = vmatpush.xpose.msra.mxu0 0.0
    %241 = vmatpush.xpose.msra.mxu0 0.0
    %242 = vmatpush.xpose.msra.mxu0 0.0
    %243 = vmatpush.xpose.msra.mxu0 0.0
    %244 = vmatpush.xpose.msra.mxu0 %v227
    %245 = vmatmul.f32.gmra.mxu0 %v224
    %v246 = vpop.f32.mrf.mxu0
    %v247 = vadd.f32 0.0, %v246
    %248 = vdwg.mxu0
    %vm249 = vcmask 64512
    %v250 = vsel %vm249, %v221, -inf
    %251 = vmax.xlane.f32.xlu0 %v250
    %v252 = vpop.xlane.xlu0 %251
    %v253 = vsel %vm249, %v247, -inf
    %254 = vmax.xlane.f32.xlu0 %v253
    %v255 = vpop.xlane.xlu0 %254
    %v256 = vsub.f32 %v221, %v252
    %v257 = vsub.f32 %v247, %v255
    %v258 = vmul.f32 %v256, 1.442695
    %v259 = vpow.pop %v258
    %v260 = vmul.f32 %v257, 1.442695
    %v261 = vpow.pop %v260
    %v262 = vsel %vm249, %v259, 0.0
    %263 = vadd.xlane.f32.xlu0 %v262
    %v264 = vpop.xlane.xlu0 %263
    %v265 = vsel %vm249, %v261, 0.0
    %266 = vadd.xlane.f32.xlu0 %v265
    %v267 = vpop.xlane.xlu0 %266
    %v268 = vrcp.pop %v264
    %v269 = vrcp.pop %v267
    %v270 = vmul.f32 %v259, %v268
    %v271 = vmul.f32 %v261, %v269
    %v273 = vsel %vm249, %v270, 0
    %275 = vmatpush.msra.mxu0 0.0
    %276 = vmatpush.msra.mxu0 0.0
    %277 = vmatpush.msra.mxu0 0.0
    %278 = vmatpush.msra.mxu0 0.0
    %279 = vmatpush.msra.mxu0 0.0
    %280 = vmatpush.msra.mxu0 0.0
    %281 = vmatpush.msra.mxu0 0.0
    %282 = vmatpush.msra.mxu0 0.0
    %283 = vmatpush.msra.mxu0 0.0
    %284 = vmatpush.msra.mxu0 0.0
    %285 = vmatpush.msra.mxu0 0.0
    %286 = vmatpush.msra.mxu0 0.0
    %287 = vmatpush.msra.mxu0 0.0
    %288 = vmatpush.msra.mxu0 0.0
    %289 = vmatpush.msra.mxu0 0.0
    %290 = vmatpush.msra.mxu0 %v192
    %291 = vmatmul.f32.gmra.mxu0 %v273
    %v292 = vpop.f32.mrf.mxu0
    %v293 = vadd.f32 0.0, %v292
    %294 = vdwg.mxu0
    %v296 = vsel %vm249, %v271, 0
    %298 = vmatpush.msra.mxu0 0.0
    %299 = vmatpush.msra.mxu0 0.0
    %300 = vmatpush.msra.mxu0 0.0
    %301 = vmatpush.msra.mxu0 0.0
    %302 = vmatpush.msra.mxu0 0.0
    %303 = vmatpush.msra.mxu0 0.0
    %304 = vmatpush.msra.mxu0 0.0
    %305 = vmatpush.msra.mxu0 0.0
    %306 = vmatpush.msra.mxu0 0.0
    %307 = vmatpush.msra.mxu0 0.0
    %308 = vmatpush.msra.mxu0 0.0
    %309 = vmatpush.msra.mxu0 0.0
    %310 = vmatpush.msra.mxu0 0.0
    %311 = vmatpush.msra.mxu0 0.0
    %312 = vmatpush.msra.mxu0 0.0
    %313 = vmatpush.msra.mxu0 %v195
    %314 = vmatmul.f32.gmra.mxu0 %v296
    %v315 = vpop.f32.mrf.mxu0
    %v316 = vadd.f32 0.0, %v315
    %317 = vdwg.mxu0
    %318 = vst.msk [vmem:[#allocation11] sm:$0xff] %vm107, %v293
    %319 = vst.msk [vmem:[#allocation11 + $0x8] sm:$0xff] %vm107, %v316
    // Predicated region
    $region42: #{tpu_custom_call.1} parent=1 // pred_check
      _
    $region43: #{tpu_custom_call.1} parent=1 // pred_check_branch
      %321 = sbr.rel (0) target = $region45
    $region44: #{tpu_custom_call.1} parent=1 // pred_region
      %323 = vsyncadd [#allocation4], 0
      %s324 = sshll.u32 [#allocation11], 4
      %s325 = int_to_ptr.vmem [resolvable:$true] %s324
      %s326 = sshll.u32 %s5, 4
      %s327 = int_to_ptr.hbm [resolvable:$true] %s326
      %332 = dma.vmem_to_hbm [thread:$0]  %s325, 256, %s327, [#allocation4], 128, 128, 8
    $region45: #{tpu_custom_call.1} parent=1 // pred_fallthru
      _
    // Predicated region
    $region46: #{tpu_custom_call.1} parent=1 // pred_check
      _
    $region47: #{tpu_custom_call.1} parent=1 // pred_check_branch
      %334 = sbr.rel (0) target = $region49
    $region48: #{tpu_custom_call.1} parent=1 // pred_region
      %336 = dma.done [#allocation4], 256
    $region49: #{tpu_custom_call.1} parent=1 // pred_fallthru
      _
    %337 = vsyncpa [#allocation3], 1
    %338 = vsyncpa [#allocation6], 1
    %339 = vsyncpa [#allocation9], 1
    %340 = vsyncpa [#allocation4], 1

</llo_original>
